<compile_context>
chip_gen: v5e
topology: v5e:2x2
jax: 0.10.0
libtpu: 0.0.40
codegen_flags: <defaults>
</compile_context>

<pallas_src>
import jax
import jax.numpy as jnp
from jax import lax
from jax.experimental import pallas as pl
from jax.experimental.pallas import tpu as pltpu

LANE = 128
ROW_GROUP = 32  # rows per register-resident accumulator group


def _round_up(x, m):
    return (x + m - 1) // m * m


def _vmem_capacity_bytes():
    try:
        info = pltpu.get_tpu_info()
        cap = getattr(info, "vmem_capacity_bytes", None)
        if cap:
            return int(cap)
    except Exception:
        pass
    return 64 * 1024 * 1024  # conservative default: assume v7x's 64 MiB


def _structural_classifier_kernel(ent_ref, ali_ref, cur_ref,
                                  w1_ref, b1_ref, w2_ref, b2_ref,
                                  w3_ref, b3_ref, out_ref):
    TB, HW = ent_ref.shape
    nchunks = HW // LANE
    rem = HW - nchunks * LANE
    inv_hw = 1.0 / HW

    def field_stats(ref, r_off, rg):
        """Row-wise mean / unbiased-std / max / min over HW for rg rows."""

        def load(c_off, width):
            # Native-dtype load; cast to f32 on the VPU right after the load.
            return ref[pl.ds(r_off, rg), pl.ds(c_off, width)].astype(jnp.float32)

        if nchunks >= 1:
            x0 = load(0, LANE)
            carry = (x0, x0 * x0, x0, x0)
            if nchunks > 1:
                def body(c, carry):
                    s, q, mx, mn = carry
                    off = pl.multiple_of(c * LANE, LANE)
                    x = load(off, LANE)
                    return (s + x, q + x * x,
                            jnp.maximum(mx, x), jnp.minimum(mn, x))

                carry = lax.fori_loop(1, nchunks, body, carry,
                                      unroll=min(4, nchunks - 1))
            s, q, mx, mn = carry
            tot = jnp.sum(s, axis=-1, keepdims=True)
            totq = jnp.sum(q, axis=-1, keepdims=True)
            fmax = jnp.max(mx, axis=-1, keepdims=True)
            fmin = jnp.min(mn, axis=-1, keepdims=True)
            if rem:
                # Ragged tail: one short [rg, rem] chunk, no full-HW temporaries.
                xt = load(nchunks * LANE, rem)
                tot = tot + jnp.sum(xt, axis=-1, keepdims=True)
                totq = totq + jnp.sum(xt * xt, axis=-1, keepdims=True)
                fmax = jnp.maximum(fmax, jnp.max(xt, axis=-1, keepdims=True))
                fmin = jnp.minimum(fmin, jnp.min(xt, axis=-1, keepdims=True))
        else:
            x = load(0, HW)
            tot = jnp.sum(x, axis=-1, keepdims=True)
            totq = jnp.sum(x * x, axis=-1, keepdims=True)
            fmax = jnp.max(x, axis=-1, keepdims=True)
            fmin = jnp.min(x, axis=-1, keepdims=True)

        mean = tot * inv_hw
        if HW > 1:
            # torch.std default is unbiased (N-1), derived from single-pass sums.
            # TODO(synk): switch to Welford chunk-merging if bit-closeness to
            # torch's two-pass std matters for large-|mean| inputs.
            var = jnp.maximum((totq - HW * mean * mean) / (HW - 1), 0.0)
            std = jnp.sqrt(var)
        else:
            std = jnp.zeros_like(mean)  # torch yields NaN for N=1; guard to 0.
        return mean, std, fmax, fmin

    def process_group(r_off, rg):
        stats = []
        for ref in (ent_ref, ali_ref, cur_ref):
            stats.extend(field_stats(ref, r_off, rg))

        # Layer 1 on the VPU: h1 = b1 + sum_k stat_k * w1[k, :].
        # (12 broadcast FMAs; no feature tile, no iota/where chain, no K=12 MXU.)
        h1 = b1_ref[...]
        for k, s in enumerate(stats):
            h1 = h1 + s * w1_ref[k:k + 1, :]
        h1 = jnp.maximum(h1, 0.0)
        # TODO(synk): nn.Dropout(0.1) is identity in eval mode; intentionally omitted.
        h2 = jnp.dot(h1, w2_ref[...], preferred_element_type=jnp.float32) + b2_ref[...]
        h2 = jnp.maximum(h2, 0.0)
        out = jnp.dot(h2, w3_ref[...], preferred_element_type=jnp.float32) + b3_ref[...]
        out_ref[pl.ds(r_off, rg), :] = out.astype(out_ref.dtype)

    num_full = TB // ROW_GROUP
    tail = TB - num_full * ROW_GROUP
    if num_full >= 2:
        @pl.loop(0, num_full)
        def _(g):
            process_group(pl.multiple_of(g * ROW_GROUP, ROW_GROUP), ROW_GROUP)
    elif num_full == 1:
        process_group(0, ROW_GROUP)
    if tail:
        process_group(num_full * ROW_GROUP, tail)


def structural_classifier(entropy, alignment, curvature, params):
    """entropy/alignment/curvature: [B, 1, H, W]; returns [B, num_classes] f32."""
    B = entropy.shape[0]
    HW = int(entropy.shape[-2]) * int(entropy.shape[-1])

    # No dtype cast here: fields stream in their native dtype and are cast
    # chunk-by-chunk inside the kernel (avoids an extra full HBM pass).
    ent = entropy.reshape(B, HW)
    ali = alignment.reshape(B, HW)
    cur = curvature.reshape(B, HW)

    w1, b1, w2, b2, w3, b3 = params
    feat_in = w1.shape[0]          # signature_channels * 4 = 12
    hidden = w1.shape[1]
    hidden2 = w2.shape[1]
    num_classes = w3.shape[1]
    assert feat_in == 12, "StructuralClassifier uses 3 fields x 4 stats = 12 features"

    f32 = jnp.float32
    H1 = _round_up(hidden, LANE)
    H2 = _round_up(hidden2, LANE)
    NC = _round_up(num_classes, LANE)

    # Zero-pad MLP dims to 128 lanes -> lane-dense, unmasked tiles; padded
    # rows/cols are exactly zero so they do not change the real logits.
    w1p = jnp.zeros((feat_in, H1), f32).at[:, :hidden].set(w1.astype(f32))
    b1p = jnp.zeros((1, H1), f32).at[:, :hidden].set(b1.reshape(1, -1).astype(f32))
    w2p = jnp.zeros((H1, H2), f32).at[:hidden, :hidden2].set(w2.astype(f32))
    b2p = jnp.zeros((1, H2), f32).at[:, :hidden2].set(b2.reshape(1, -1).astype(f32))
    w3p = jnp.zeros((H2, NC), f32).at[:hidden2, :num_classes].set(w3.astype(f32))
    b3p = jnp.zeros((1, NC), f32).at[:, :num_classes].set(b3.reshape(1, -1).astype(f32))

    # --- batch tile sizing ---------------------------------------------------
    vmem_cap = _vmem_capacity_bytes()
    big_vmem = vmem_cap >= 96 * 1024 * 1024   # v5e/v6e (128 MiB) vs v7x (64 MiB)
    if big_vmem:
        input_budget = 64 * 1024 * 1024
        tb_hard_cap = 2048
        vmem_limit = 96 * 1024 * 1024
    else:
        input_budget = 24 * 1024 * 1024
        tb_hard_cap = 512
        vmem_limit = 48 * 1024 * 1024

    bytes_per_row = HW * (ent.dtype.itemsize + ali.dtype.itemsize
                          + cur.dtype.itemsize) * 2   # x2: double-buffered
    tb_cap = (input_budget // max(bytes_per_row, 1)) // ROW_GROUP * ROW_GROUP

    if tb_cap == 0:
        # TODO(synk): for very large HW (even 8 rows exceed the input budget),
        # tile HW through a second "arbitrary" grid axis with VMEM stat scratch
        # instead of inflating the VMEM limit.
        TB = min(B, 8)
        needed = TB * bytes_per_row + (8 << 20)
        vmem_limit = min(max(vmem_limit, needed),
                         max(vmem_cap - (8 << 20), vmem_limit))
    elif B <= min(tb_cap, tb_hard_cap):
        TB = B
        # v7x has 2 TensorCores: make sure the "parallel" batch axis has >= 2
        # steps so both cores get work when the batch is big enough to split.
        if (not big_vmem) and B >= 2 * ROW_GROUP:
            TB = _round_up((B + 1) // 2, ROW_GROUP)
    else:
        TB = min(tb_cap, tb_hard_cap)

    grid = (pl.cdiv(B, TB),)

    field_spec = pl.BlockSpec((TB, HW), lambda i: (i, 0))

    def const_spec(shape):
        return pl.BlockSpec(shape, lambda i: (0, 0))

    out = pl.pallas_call(
        _structural_classifier_kernel,
        out_shape=jax.ShapeDtypeStruct((B, NC), jnp.float32),
        grid=grid,
        in_specs=[field_spec, field_spec, field_spec,
                  const_spec((feat_in, H1)), const_spec((1, H1)),
                  const_spec((H1, H2)), const_spec((1, H2)),
                  const_spec((H2, NC)), const_spec((1, NC))],
        out_specs=pl.BlockSpec((TB, NC), lambda i: (i, 0)),
        compiler_params=pltpu.CompilerParams(
            dimension_semantics=("parallel",),
            vmem_limit_bytes=int(vmem_limit)),
    )(ent, ali, cur, w1p, b1p, w2p, b2p, w3p, b3p)

    return out[:, :num_classes]


def _reference(entropy, alignment, curvature, params):
    """Pure-JAX reference of the PyTorch forward (eval mode)."""
    B = entropy.shape[0]
    feats = []
    for field in (entropy, alignment, curvature):
        x = field.reshape(B, -1).astype(jnp.float32)
        feats.extend([x.mean(-1, keepdims=True),
                      x.std(-1, keepdims=True, ddof=1),
                      x.max(-1, keepdims=True),
                      x.min(-1, keepdims=True)])
    f = jnp.concatenate(feats, axis=-1)
    w1, b1, w2, b2, w3, b3 = params
    h1 = jnp.maximum(f @ w1 + b1.reshape(1, -1), 0.0)
    h2 = jnp.maximum(h1 @ w2 + b2.reshape(1, -1), 0.0)
    return h2 @ w3 + b3.reshape(1, -1)


def _linear_init(kw, kb, fan_in, fan_out):
    # PyTorch nn.Linear default: U(-1/sqrt(fan_in), 1/sqrt(fan_in))
    bound = 1.0 / (fan_in ** 0.5)
    w = jax.random.uniform(kw, (fan_in, fan_out), jnp.float32, -bound, bound)
    b = jax.random.uniform(kb, (1, fan_out), jnp.float32, -bound, bound)
    return w, b


def _run_case(key, B, H, W, hidden_dim, num_classes):
    keys = jax.random.split(key, 9)
    entropy = jax.random.uniform(keys[0], (B, 1, H, W), jnp.float32)
    alignment = jax.random.uniform(keys[1], (B, 1, H, W), jnp.float32) * 2.0 - 1.0
    curvature = jax.random.normal(keys[2], (B, 1, H, W), jnp.float32)

    signature_channels = 3
    w1, b1 = _linear_init(keys[3], keys[4], signature_channels * 4, hidden_dim)
    w2, b2 = _linear_init(keys[5], keys[6], hidden_dim, hidden_dim // 2)
    w3, b3 = _linear_init(keys[7], keys[8], hidden_dim // 2, num_classes)
    params = (w1, b1, w2, b2, w3, b3)

    logits = structural_classifier(entropy, alignment, curvature, params)
    jax.block_until_ready(logits)
    assert logits.shape == (B, num_classes)
    assert logits.dtype == jnp.float32

    ref = _reference(entropy, alignment, curvature, params)
    assert jnp.allclose(logits, ref, atol=1e-3, rtol=1e-3), (logits, ref)


if __name__ == "__main__":
    key = jax.random.PRNGKey(0)
    k1, k2 = jax.random.split(key)
    # Small case matching the module defaults (B=2, 16x16 fields).
    _run_case(k1, B=2, H=16, W=16, hidden_dim=128, num_classes=10)
    # Larger case: exercises the chunked HW loop, multiple row groups,
    # and (on small-VMEM parts) a multi-step / ragged batch grid.
    _run_case(k2, B=80, H=32, W=32, hidden_dim=128, num_classes=10)
    print("KERNEL_OK")
</pallas_src>

<mosaic_0001>
module attributes {stable_mosaic.version = 11 : i64} {
  func.func @_structural_classifier_kernel(%arg0: i32, %arg1: memref<2x256xf32, #tpu.memory_space<vmem>>, %arg2: memref<2x256xf32, #tpu.memory_space<vmem>>, %arg3: memref<2x256xf32, #tpu.memory_space<vmem>>, %arg4: memref<12x128xf32, #tpu.memory_space<vmem>>, %arg5: memref<1x128xf32, #tpu.memory_space<vmem>>, %arg6: memref<128x128xf32, #tpu.memory_space<vmem>>, %arg7: memref<1x128xf32, #tpu.memory_space<vmem>>, %arg8: memref<128x128xf32, #tpu.memory_space<vmem>>, %arg9: memref<1x128xf32, #tpu.memory_space<vmem>>, %arg10: memref<2x128xf32, #tpu.memory_space<vmem>>) attributes {dimension_semantics = [#tpu.dimension_semantics<parallel>], iteration_bounds = array<i64: 1>, scalar_prefetch = 0 : i64, scratch_operands = 0 : i64, tpu.core_type = #tpu.core_type<tc>, window_params = [{transform_indices = @transform_0, window_bounds = array<i64: 2, 256>}, {transform_indices = @transform_1, window_bounds = array<i64: 2, 256>}, {transform_indices = @transform_2, window_bounds = array<i64: 2, 256>}, {pipeline_mode = #tpu.pipeline_mode<synchronous>, transform_indices = @transform_3, window_bounds = array<i64: 12, 128>}, {pipeline_mode = #tpu.pipeline_mode<synchronous>, transform_indices = @transform_4, window_bounds = array<i64: 1, 128>}, {pipeline_mode = #tpu.pipeline_mode<synchronous>, transform_indices = @transform_5, window_bounds = array<i64: 128, 128>}, {pipeline_mode = #tpu.pipeline_mode<synchronous>, transform_indices = @transform_6, window_bounds = array<i64: 1, 128>}, {pipeline_mode = #tpu.pipeline_mode<synchronous>, transform_indices = @transform_7, window_bounds = array<i64: 128, 128>}, {pipeline_mode = #tpu.pipeline_mode<synchronous>, transform_indices = @transform_8, window_bounds = array<i64: 1, 128>}, {transform_indices = @transform_9, window_bounds = array<i64: 2, 128>}]} {
    %c0 = arith.constant 0 : index
    %c0_0 = arith.constant 0 : index
    %0 = vector.load %arg1[%c0, %c0_0] : memref<2x256xf32, #tpu.memory_space<vmem>>, vector<2x128xf32>
    %1 = arith.mulf %0, %0 : vector<2x128xf32>
    %c1_i32 = arith.constant 1 : i32
    %c128_i32 = arith.constant 128 : i32
    %2 = arith.muli %c1_i32, %c128_i32 : i32
    %3 = tpu.assume_multiple %2, 128 : i32
    %c0_1 = arith.constant 0 : index
    %4 = arith.index_cast %3 : i32 to index
    %5 = vector.load %arg1[%c0_1, %4] : memref<2x256xf32, #tpu.memory_space<vmem>>, vector<2x128xf32>
    %6 = arith.addf %0, %5 : vector<2x128xf32>
    %7 = arith.mulf %5, %5 : vector<2x128xf32>
    %8 = arith.addf %1, %7 : vector<2x128xf32>
    %9 = arith.maximumf %0, %5 : vector<2x128xf32>
    %10 = arith.minimumf %0, %5 : vector<2x128xf32>
    %c1_i32_2 = arith.constant 1 : i32
    %cst = arith.constant dense<0.000000e+00> : vector<2xf32>
    %11 = vector.multi_reduction <add>, %6, %cst [1] : vector<2x128xf32> to vector<2xf32>
    %12 = vector.shape_cast %11 : vector<2xf32> to vector<2x1xf32>
    %cst_3 = arith.constant dense<0.000000e+00> : vector<2xf32>
    %13 = vector.multi_reduction <add>, %8, %cst_3 [1] : vector<2x128xf32> to vector<2xf32>
    %14 = vector.shape_cast %13 : vector<2xf32> to vector<2x1xf32>
    %cst_4 = arith.constant dense<0xFF800000> : vector<2xf32>
    %15 = vector.multi_reduction <maximumf>, %9, %cst_4 [1] : vector<2x128xf32> to vector<2xf32>
    %16 = vector.shape_cast %15 : vector<2xf32> to vector<2x1xf32>
    %cst_5 = arith.constant dense<0x7F800000> : vector<2xf32>
    %17 = vector.multi_reduction <minimumf>, %10, %cst_5 [1] : vector<2x128xf32> to vector<2xf32>
    %18 = vector.shape_cast %17 : vector<2xf32> to vector<2x1xf32>
    %cst_6 = arith.constant 3.906250e-03 : f32
    %19 = vector.broadcast %cst_6 : f32 to vector<2x1xf32>
    %20 = arith.mulf %12, %19 : vector<2x1xf32>
    %cst_7 = arith.constant 2.560000e+02 : f32
    %21 = vector.broadcast %cst_7 : f32 to vector<2x1xf32>
    %22 = arith.mulf %21, %20 : vector<2x1xf32>
    %23 = arith.mulf %22, %20 : vector<2x1xf32>
    %24 = arith.subf %14, %23 : vector<2x1xf32>
    %cst_8 = arith.constant 2.550000e+02 : f32
    %25 = vector.broadcast %cst_8 : f32 to vector<2x1xf32>
    %26 = arith.divf %24, %25 : vector<2x1xf32>
    %cst_9 = arith.constant 0.000000e+00 : f32
    %27 = vector.broadcast %cst_9 : f32 to vector<2x1xf32>
    %28 = arith.maximumf %26, %27 : vector<2x1xf32>
    %29 = math.sqrt %28 : vector<2x1xf32>
    %c0_10 = arith.constant 0 : index
    %c0_11 = arith.constant 0 : index
    %30 = vector.load %arg2[%c0_10, %c0_11] : memref<2x256xf32, #tpu.memory_space<vmem>>, vector<2x128xf32>
    %31 = arith.mulf %30, %30 : vector<2x128xf32>
    %c1_i32_12 = arith.constant 1 : i32
    %c128_i32_13 = arith.constant 128 : i32
    %32 = arith.muli %c1_i32_12, %c128_i32_13 : i32
    %33 = tpu.assume_multiple %32, 128 : i32
    %c0_14 = arith.constant 0 : index
    %34 = arith.index_cast %33 : i32 to index
    %35 = vector.load %arg2[%c0_14, %34] : memref<2x256xf32, #tpu.memory_space<vmem>>, vector<2x128xf32>
    %36 = arith.addf %30, %35 : vector<2x128xf32>
    %37 = arith.mulf %35, %35 : vector<2x128xf32>
    %38 = arith.addf %31, %37 : vector<2x128xf32>
    %39 = arith.maximumf %30, %35 : vector<2x128xf32>
    %40 = arith.minimumf %30, %35 : vector<2x128xf32>
    %c1_i32_15 = arith.constant 1 : i32
    %cst_16 = arith.constant dense<0.000000e+00> : vector<2xf32>
    %41 = vector.multi_reduction <add>, %36, %cst_16 [1] : vector<2x128xf32> to vector<2xf32>
    %42 = vector.shape_cast %41 : vector<2xf32> to vector<2x1xf32>
    %cst_17 = arith.constant dense<0.000000e+00> : vector<2xf32>
    %43 = vector.multi_reduction <add>, %38, %cst_17 [1] : vector<2x128xf32> to vector<2xf32>
    %44 = vector.shape_cast %43 : vector<2xf32> to vector<2x1xf32>
    %cst_18 = arith.constant dense<0xFF800000> : vector<2xf32>
    %45 = vector.multi_reduction <maximumf>, %39, %cst_18 [1] : vector<2x128xf32> to vector<2xf32>
    %46 = vector.shape_cast %45 : vector<2xf32> to vector<2x1xf32>
    %cst_19 = arith.constant dense<0x7F800000> : vector<2xf32>
    %47 = vector.multi_reduction <minimumf>, %40, %cst_19 [1] : vector<2x128xf32> to vector<2xf32>
    %48 = vector.shape_cast %47 : vector<2xf32> to vector<2x1xf32>
    %cst_20 = arith.constant 3.906250e-03 : f32
    %49 = vector.broadcast %cst_20 : f32 to vector<2x1xf32>
    %50 = arith.mulf %42, %49 : vector<2x1xf32>
    %cst_21 = arith.constant 2.560000e+02 : f32
    %51 = vector.broadcast %cst_21 : f32 to vector<2x1xf32>
    %52 = arith.mulf %51, %50 : vector<2x1xf32>
    %53 = arith.mulf %52, %50 : vector<2x1xf32>
    %54 = arith.subf %44, %53 : vector<2x1xf32>
    %cst_22 = arith.constant 2.550000e+02 : f32
    %55 = vector.broadcast %cst_22 : f32 to vector<2x1xf32>
    %56 = arith.divf %54, %55 : vector<2x1xf32>
    %cst_23 = arith.constant 0.000000e+00 : f32
    %57 = vector.broadcast %cst_23 : f32 to vector<2x1xf32>
    %58 = arith.maximumf %56, %57 : vector<2x1xf32>
    %59 = math.sqrt %58 : vector<2x1xf32>
    %c0_24 = arith.constant 0 : index
    %c0_25 = arith.constant 0 : index
    %60 = vector.load %arg3[%c0_24, %c0_25] : memref<2x256xf32, #tpu.memory_space<vmem>>, vector<2x128xf32>
    %61 = arith.mulf %60, %60 : vector<2x128xf32>
    %c1_i32_26 = arith.constant 1 : i32
    %c128_i32_27 = arith.constant 128 : i32
    %62 = arith.muli %c1_i32_26, %c128_i32_27 : i32
    %63 = tpu.assume_multiple %62, 128 : i32
    %c0_28 = arith.constant 0 : index
    %64 = arith.index_cast %63 : i32 to index
    %65 = vector.load %arg3[%c0_28, %64] : memref<2x256xf32, #tpu.memory_space<vmem>>, vector<2x128xf32>
    %66 = arith.addf %60, %65 : vector<2x128xf32>
    %67 = arith.mulf %65, %65 : vector<2x128xf32>
    %68 = arith.addf %61, %67 : vector<2x128xf32>
    %69 = arith.maximumf %60, %65 : vector<2x128xf32>
    %70 = arith.minimumf %60, %65 : vector<2x128xf32>
    %c1_i32_29 = arith.constant 1 : i32
    %cst_30 = arith.constant dense<0.000000e+00> : vector<2xf32>
    %71 = vector.multi_reduction <add>, %66, %cst_30 [1] : vector<2x128xf32> to vector<2xf32>
    %72 = vector.shape_cast %71 : vector<2xf32> to vector<2x1xf32>
    %cst_31 = arith.constant dense<0.000000e+00> : vector<2xf32>
    %73 = vector.multi_reduction <add>, %68, %cst_31 [1] : vector<2x128xf32> to vector<2xf32>
    %74 = vector.shape_cast %73 : vector<2xf32> to vector<2x1xf32>
    %cst_32 = arith.constant dense<0xFF800000> : vector<2xf32>
    %75 = vector.multi_reduction <maximumf>, %69, %cst_32 [1] : vector<2x128xf32> to vector<2xf32>
    %76 = vector.shape_cast %75 : vector<2xf32> to vector<2x1xf32>
    %cst_33 = arith.constant dense<0x7F800000> : vector<2xf32>
    %77 = vector.multi_reduction <minimumf>, %70, %cst_33 [1] : vector<2x128xf32> to vector<2xf32>
    %78 = vector.shape_cast %77 : vector<2xf32> to vector<2x1xf32>
    %cst_34 = arith.constant 3.906250e-03 : f32
    %79 = vector.broadcast %cst_34 : f32 to vector<2x1xf32>
    %80 = arith.mulf %72, %79 : vector<2x1xf32>
    %cst_35 = arith.constant 2.560000e+02 : f32
    %81 = vector.broadcast %cst_35 : f32 to vector<2x1xf32>
    %82 = arith.mulf %81, %80 : vector<2x1xf32>
    %83 = arith.mulf %82, %80 : vector<2x1xf32>
    %84 = arith.subf %74, %83 : vector<2x1xf32>
    %cst_36 = arith.constant 2.550000e+02 : f32
    %85 = vector.broadcast %cst_36 : f32 to vector<2x1xf32>
    %86 = arith.divf %84, %85 : vector<2x1xf32>
    %cst_37 = arith.constant 0.000000e+00 : f32
    %87 = vector.broadcast %cst_37 : f32 to vector<2x1xf32>
    %88 = arith.maximumf %86, %87 : vector<2x1xf32>
    %89 = math.sqrt %88 : vector<2x1xf32>
    %c0_38 = arith.constant 0 : index
    %c0_39 = arith.constant 0 : index
    %90 = vector.load %arg5[%c0_38, %c0_39] : memref<1x128xf32, #tpu.memory_space<vmem>>, vector<1x128xf32>
    %c0_40 = arith.constant 0 : index
    %c0_41 = arith.constant 0 : index
    %91 = vector.load %arg4[%c0_40, %c0_41] : memref<12x128xf32, #tpu.memory_space<vmem>>, vector<1x128xf32>
    %92 = vector.broadcast %20 : vector<2x1xf32> to vector<2x128xf32>
    %93 = vector.broadcast %91 : vector<1x128xf32> to vector<2x128xf32>
    %94 = arith.mulf %92, %93 : vector<2x128xf32>
    %95 = vector.broadcast %90 : vector<1x128xf32> to vector<2x128xf32>
    %96 = arith.addf %95, %94 : vector<2x128xf32>
    %c1 = arith.constant 1 : index
    %c0_42 = arith.constant 0 : index
    %97 = vector.load %arg4[%c1, %c0_42] : memref<12x128xf32, #tpu.memory_space<vmem>>, vector<1x128xf32>
    %98 = vector.broadcast %29 : vector<2x1xf32> to vector<2x128xf32>
    %99 = vector.broadcast %97 : vector<1x128xf32> to vector<2x128xf32>
    %100 = arith.mulf %98, %99 : vector<2x128xf32>
    %101 = arith.addf %96, %100 : vector<2x128xf32>
    %c2 = arith.constant 2 : index
    %c0_43 = arith.constant 0 : index
    %102 = vector.load %arg4[%c2, %c0_43] : memref<12x128xf32, #tpu.memory_space<vmem>>, vector<1x128xf32>
    %103 = vector.broadcast %16 : vector<2x1xf32> to vector<2x128xf32>
    %104 = vector.broadcast %102 : vector<1x128xf32> to vector<2x128xf32>
    %105 = arith.mulf %103, %104 : vector<2x128xf32>
    %106 = arith.addf %101, %105 : vector<2x128xf32>
    %c3 = arith.constant 3 : index
    %c0_44 = arith.constant 0 : index
    %107 = vector.load %arg4[%c3, %c0_44] : memref<12x128xf32, #tpu.memory_space<vmem>>, vector<1x128xf32>
    %108 = vector.broadcast %18 : vector<2x1xf32> to vector<2x128xf32>
    %109 = vector.broadcast %107 : vector<1x128xf32> to vector<2x128xf32>
    %110 = arith.mulf %108, %109 : vector<2x128xf32>
    %111 = arith.addf %106, %110 : vector<2x128xf32>
    %c4 = arith.constant 4 : index
    %c0_45 = arith.constant 0 : index
    %112 = vector.load %arg4[%c4, %c0_45] : memref<12x128xf32, #tpu.memory_space<vmem>>, vector<1x128xf32>
    %113 = vector.broadcast %50 : vector<2x1xf32> to vector<2x128xf32>
    %114 = vector.broadcast %112 : vector<1x128xf32> to vector<2x128xf32>
    %115 = arith.mulf %113, %114 : vector<2x128xf32>
    %116 = arith.addf %111, %115 : vector<2x128xf32>
    %c5 = arith.constant 5 : index
    %c0_46 = arith.constant 0 : index
    %117 = vector.load %arg4[%c5, %c0_46] : memref<12x128xf32, #tpu.memory_space<vmem>>, vector<1x128xf32>
    %118 = vector.broadcast %59 : vector<2x1xf32> to vector<2x128xf32>
    %119 = vector.broadcast %117 : vector<1x128xf32> to vector<2x128xf32>
    %120 = arith.mulf %118, %119 : vector<2x128xf32>
    %121 = arith.addf %116, %120 : vector<2x128xf32>
    %c6 = arith.constant 6 : index
    %c0_47 = arith.constant 0 : index
    %122 = vector.load %arg4[%c6, %c0_47] : memref<12x128xf32, #tpu.memory_space<vmem>>, vector<1x128xf32>
    %123 = vector.broadcast %46 : vector<2x1xf32> to vector<2x128xf32>
    %124 = vector.broadcast %122 : vector<1x128xf32> to vector<2x128xf32>
    %125 = arith.mulf %123, %124 : vector<2x128xf32>
    %126 = arith.addf %121, %125 : vector<2x128xf32>
    %c7 = arith.constant 7 : index
    %c0_48 = arith.constant 0 : index
    %127 = vector.load %arg4[%c7, %c0_48] : memref<12x128xf32, #tpu.memory_space<vmem>>, vector<1x128xf32>
    %128 = vector.broadcast %48 : vector<2x1xf32> to vector<2x128xf32>
    %129 = vector.broadcast %127 : vector<1x128xf32> to vector<2x128xf32>
    %130 = arith.mulf %128, %129 : vector<2x128xf32>
    %131 = arith.addf %126, %130 : vector<2x128xf32>
    %c8 = arith.constant 8 : index
    %c0_49 = arith.constant 0 : index
    %132 = vector.load %arg4[%c8, %c0_49] : memref<12x128xf32, #tpu.memory_space<vmem>>, vector<1x128xf32>
    %133 = vector.broadcast %80 : vector<2x1xf32> to vector<2x128xf32>
    %134 = vector.broadcast %132 : vector<1x128xf32> to vector<2x128xf32>
    %135 = arith.mulf %133, %134 : vector<2x128xf32>
    %136 = arith.addf %131, %135 : vector<2x128xf32>
    %c9 = arith.constant 9 : index
    %c0_50 = arith.constant 0 : index
    %137 = vector.load %arg4[%c9, %c0_50] : memref<12x128xf32, #tpu.memory_space<vmem>>, vector<1x128xf32>
    %138 = vector.broadcast %89 : vector<2x1xf32> to vector<2x128xf32>
    %139 = vector.broadcast %137 : vector<1x128xf32> to vector<2x128xf32>
    %140 = arith.mulf %138, %139 : vector<2x128xf32>
    %141 = arith.addf %136, %140 : vector<2x128xf32>
    %c10 = arith.constant 10 : index
    %c0_51 = arith.constant 0 : index
    %142 = vector.load %arg4[%c10, %c0_51] : memref<12x128xf32, #tpu.memory_space<vmem>>, vector<1x128xf32>
    %143 = vector.broadcast %76 : vector<2x1xf32> to vector<2x128xf32>
    %144 = vector.broadcast %142 : vector<1x128xf32> to vector<2x128xf32>
    %145 = arith.mulf %143, %144 : vector<2x128xf32>
    %146 = arith.addf %141, %145 : vector<2x128xf32>
    %c11 = arith.constant 11 : index
    %c0_52 = arith.constant 0 : index
    %147 = vector.load %arg4[%c11, %c0_52] : memref<12x128xf32, #tpu.memory_space<vmem>>, vector<1x128xf32>
    %148 = vector.broadcast %78 : vector<2x1xf32> to vector<2x128xf32>
    %149 = vector.broadcast %147 : vector<1x128xf32> to vector<2x128xf32>
    %150 = arith.mulf %148, %149 : vector<2x128xf32>
    %151 = arith.addf %146, %150 : vector<2x128xf32>
    %cst_53 = arith.constant 0.000000e+00 : f32
    %152 = vector.broadcast %cst_53 : f32 to vector<2x128xf32>
    %153 = arith.maximumf %151, %152 : vector<2x128xf32>
    %c0_54 = arith.constant 0 : index
    %c0_55 = arith.constant 0 : index
    %154 = vector.load %arg6[%c0_54, %c0_55] : memref<128x128xf32, #tpu.memory_space<vmem>>, vector<128x128xf32>
    %cst_56 = arith.constant dense<0.000000e+00> : vector<2x128xf32>
    %155 = tpu.matmul %153, %154, %cst_56 {dimension_numbers = #tpu.dot_dimension_numbers<[1], [0], [0], [1], [0, 0, 1, 1], [], []>} : vector<2x128xf32>, vector<128x128xf32>, vector<2x128xf32> -> vector<2x128xf32>
    %c0_57 = arith.constant 0 : index
    %c0_58 = arith.constant 0 : index
    %156 = vector.load %arg7[%c0_57, %c0_58] : memref<1x128xf32, #tpu.memory_space<vmem>>, vector<1x128xf32>
    %157 = vector.broadcast %156 : vector<1x128xf32> to vector<2x128xf32>
    %158 = arith.addf %155, %157 : vector<2x128xf32>
    %cst_59 = arith.constant 0.000000e+00 : f32
    %159 = vector.broadcast %cst_59 : f32 to vector<2x128xf32>
    %160 = arith.maximumf %158, %159 : vector<2x128xf32>
    %c0_60 = arith.constant 0 : index
    %c0_61 = arith.constant 0 : index
    %161 = vector.load %arg8[%c0_60, %c0_61] : memref<128x128xf32, #tpu.memory_space<vmem>>, vector<128x128xf32>
    %cst_62 = arith.constant dense<0.000000e+00> : vector<2x128xf32>
    %162 = tpu.matmul %160, %161, %cst_62 {dimension_numbers = #tpu.dot_dimension_numbers<[1], [0], [0], [1], [0, 0, 1, 1], [], []>} : vector<2x128xf32>, vector<128x128xf32>, vector<2x128xf32> -> vector<2x128xf32>
    %c0_63 = arith.constant 0 : index
    %c0_64 = arith.constant 0 : index
    %163 = vector.load %arg9[%c0_63, %c0_64] : memref<1x128xf32, #tpu.memory_space<vmem>>, vector<1x128xf32>
    %164 = vector.broadcast %163 : vector<1x128xf32> to vector<2x128xf32>
    %165 = arith.addf %162, %164 : vector<2x128xf32>
    %c0_65 = arith.constant 0 : index
    %c0_66 = arith.constant 0 : index
    %166 = vector.load %arg10[%c0_65, %c0_66] : memref<2x128xf32, #tpu.memory_space<vmem>>, vector<2x128xf32>
    tpu.vector_store %arg10[%c0_65, %c0_66], %165 {strides = array<i32>} : memref<2x128xf32, #tpu.memory_space<vmem>>, vector<2x128xf32>,
    return
  }
  func.func @transform_0(%arg0: i32) -> (i32, i32) {
    %c0_i32 = arith.constant 0 : i32
    %c0_i32_0 = arith.constant 0 : i32
    return %arg0, %c0_i32 : i32, i32
  }
  func.func @transform_1(%arg0: i32) -> (i32, i32) {
    %c0_i32 = arith.constant 0 : i32
    %c0_i32_0 = arith.constant 0 : i32
    return %arg0, %c0_i32 : i32, i32
  }
  func.func @transform_2(%arg0: i32) -> (i32, i32) {
    %c0_i32 = arith.constant 0 : i32
    %c0_i32_0 = arith.constant 0 : i32
    return %arg0, %c0_i32 : i32, i32
  }
  func.func @transform_3(%arg0: i32) -> (i32, i32) {
    %c0_i32 = arith.constant 0 : i32
    %c0_i32_0 = arith.constant 0 : i32
    %c0_i32_1 = arith.constant 0 : i32
    return %c0_i32, %c0_i32_0 : i32, i32
  }
  func.func @transform_4(%arg0: i32) -> (i32, i32) {
    %c0_i32 = arith.constant 0 : i32
    %c0_i32_0 = arith.constant 0 : i32
    %c0_i32_1 = arith.constant 0 : i32
    return %c0_i32, %c0_i32_0 : i32, i32
  }
  func.func @transform_5(%arg0: i32) -> (i32, i32) {
    %c0_i32 = arith.constant 0 : i32
    %c0_i32_0 = arith.constant 0 : i32
    %c0_i32_1 = arith.constant 0 : i32
    return %c0_i32, %c0_i32_0 : i32, i32
  }
  func.func @transform_6(%arg0: i32) -> (i32, i32) {
    %c0_i32 = arith.constant 0 : i32
    %c0_i32_0 = arith.constant 0 : i32
    %c0_i32_1 = arith.constant 0 : i32
    return %c0_i32, %c0_i32_0 : i32, i32
  }
  func.func @transform_7(%arg0: i32) -> (i32, i32) {
    %c0_i32 = arith.constant 0 : i32
    %c0_i32_0 = arith.constant 0 : i32
    %c0_i32_1 = arith.constant 0 : i32
    return %c0_i32, %c0_i32_0 : i32, i32
  }
  func.func @transform_8(%arg0: i32) -> (i32, i32) {
    %c0_i32 = arith.constant 0 : i32
    %c0_i32_0 = arith.constant 0 : i32
    %c0_i32_1 = arith.constant 0 : i32
    return %c0_i32, %c0_i32_0 : i32, i32
  }
  func.func @transform_9(%arg0: i32) -> (i32, i32) {
    %c0_i32 = arith.constant 0 : i32
    %c0_i32_0 = arith.constant 0 : i32
    return %arg0, %c0_i32 : i32, i32
  }
}

</mosaic_0001>

<llo_original>
// kernel: tpu_custom_call.1
$region0: #{tpu_custom_call.1}
  #allocation0 [shape = 'u32[]', space=smem, size = 0x4, offset = 0x4, fixed_abs, tag = 'smem constant byte address 0x4 - core index']
  #allocation1 [shape = 'u32[72,128]{1,0:T(1,128)}', space=vmem, size = 0x9000, scoped, tag = 'internal scratch']
  %s0 = inlined_call_operand.hbm [shape: f32[2,256], index: 0, kind: input, shape index: {}]
  %s1 = inlined_call_operand.hbm [shape: f32[2,256], index: 1, kind: input, shape index: {}]
  %s2 = inlined_call_operand.hbm [shape: f32[2,256], index: 2, kind: input, shape index: {}]
  %s3 = inlined_call_operand.hbm [shape: f32[12,128], index: 3, kind: input, shape index: {}]
  %s4 = inlined_call_operand.vmem [shape: f32[1,128], index: 4, kind: input, shape index: {}]
  %s5 = inlined_call_operand.hbm [shape: f32[128,128], index: 5, kind: input, shape index: {}]
  %s6 = inlined_call_operand.vmem [shape: f32[1,128], index: 6, kind: input, shape index: {}]
  %s7 = inlined_call_operand.hbm [shape: f32[128,128], index: 7, kind: input, shape index: {}]
  %s8 = inlined_call_operand.vmem [shape: f32[1,128], index: 8, kind: input, shape index: {}]
  %s9 = inlined_call_operand.hbm [shape: f32[2,128], index: 9, kind: output, shape index: {}]
  %s10 = sld [smem:[#allocation0]]
  $region70: #{tpu_custom_call.1} parent=0
    _
  %s12 = ssub.s32 1, %s10
  %s13 = scalar_select 0, %s12, %s10
  $region1: #{tpu_custom_call.1} parent=0
    #allocation2 [shape = 'u8[2048]{0}', space=vmem, size = 0x800, scoped, tag = 'input window, operand 0, single buffered']
    #allocation3 [shape = 's32[1]{0}', space=sflag, size = 0x4, scoped, tag = 'scoped memory for tpu_custom_call.1']
    #allocation4 [shape = 's32[1]{0}', space=sflag, size = 0x4, scoped, tag = 'scoped memory for tpu_custom_call.1']
    #allocation5 [shape = 'u8[2048]{0}', space=vmem, size = 0x800, scoped, tag = 'input window, operand 1, single buffered']
    #allocation6 [shape = 's32[1]{0}', space=sflag, size = 0x4, scoped, tag = 'scoped memory for tpu_custom_call.1']
    #allocation7 [shape = 'u8[2048]{0}', space=vmem, size = 0x800, scoped, tag = 'input window, operand 2, single buffered']
    #allocation8 [shape = 'u8[8192]{0}', space=vmem, size = 0x2000, scoped, tag = 'input window, operand 3, single buffered']
    #allocation9 [shape = 's32[1]{0}', space=sflag, size = 0x4, scoped, tag = 'scoped memory for tpu_custom_call.1']
    #allocation10 [shape = 'u8[65536]{0}', space=vmem, size = 0x10000, scoped, tag = 'input window, operand 5, single buffered']
    #allocation11 [shape = 'u8[65536]{0}', space=vmem, size = 0x10000, scoped, tag = 'input window, operand 7, single buffered']
    #allocation12 [shape = 's32[1]{0}', space=sflag, size = 0x4, scoped, tag = 'scoped memory for tpu_custom_call.1']
    #allocation13 [shape = 'u8[1024]{0}', space=vmem, size = 0x400, scoped, tag = 'output window, operand 0, single buffered']
    %14 = vsyncpa [#allocation3], 0
    %15 = vsyncpa [#allocation6], 0
    %16 = vsyncpa [#allocation9], 0
    %17 = vsyncpa [#allocation12], 0
    %18 = vsyncpa [#allocation4], 0
    // Predicated region
    $region2: #{tpu_custom_call.1} parent=1 // pred_check
      _
    $region3: #{tpu_custom_call.1} parent=1 // pred_check_branch
      %20 = sbr.rel (0) target = $region5
    $region4: #{tpu_custom_call.1} parent=1 // pred_region
      %22 = vsyncadd [#allocation3], 0
      %s24 = sshll.u32 %s0, 4
      %s25 = int_to_ptr.hbm [resolvable:$true] %s24
      %s26 = sshll.u32 [#allocation2], 4
      %s27 = int_to_ptr.vmem [resolvable:$true] %s26
      %29 = dma.hbm_to_vmem [thread:$0]  %s25, 64, %s27, [#allocation3]
    $region5: #{tpu_custom_call.1} parent=1 // pred_fallthru
      _
    // Predicated region
    $region6: #{tpu_custom_call.1} parent=1 // pred_check
      _
    $region7: #{tpu_custom_call.1} parent=1 // pred_check_branch
      %31 = sbr.rel (0) target = $region9
    $region8: #{tpu_custom_call.1} parent=1 // pred_region
      %33 = vsyncadd [#allocation6], 0
      %s35 = sshll.u32 %s1, 4
      %s36 = int_to_ptr.hbm [resolvable:$true] %s35
      %s37 = sshll.u32 [#allocation5], 4
      %s38 = int_to_ptr.vmem [resolvable:$true] %s37
      %40 = dma.hbm_to_vmem [thread:$0]  %s36, 64, %s38, [#allocation6]
    $region9: #{tpu_custom_call.1} parent=1 // pred_fallthru
      _
    // Predicated region
    $region10: #{tpu_custom_call.1} parent=1 // pred_check
      _
    $region11: #{tpu_custom_call.1} parent=1 // pred_check_branch
      %42 = sbr.rel (0) target = $region13
    $region12: #{tpu_custom_call.1} parent=1 // pred_region
      %44 = vsyncadd [#allocation6], 0
      %s46 = sshll.u32 %s2, 4
      %s47 = int_to_ptr.hbm [resolvable:$true] %s46
      %s48 = sshll.u32 [#allocation7], 4
      %s49 = int_to_ptr.vmem [resolvable:$true] %s48
      %51 = dma.hbm_to_vmem [thread:$0]  %s47, 64, %s49, [#allocation6]
    $region13: #{tpu_custom_call.1} parent=1 // pred_fallthru
      _
    // Predicated region
    $region14: #{tpu_custom_call.1} parent=1 // pred_check
      _
    $region15: #{tpu_custom_call.1} parent=1 // pred_check_branch
      %53 = sbr.rel (0) target = $region17
    $region16: #{tpu_custom_call.1} parent=1 // pred_region
      %55 = vsyncadd [#allocation9], 0
      %s56 = sshll.u32 %s3, 4
      %s57 = int_to_ptr.hbm [resolvable:$true] %s56
      %s58 = sshll.u32 [#allocation8], 4
      %s59 = int_to_ptr.vmem [resolvable:$true] %s58
      %64 = dma.hbm_to_vmem [thread:$0]  %s57, 256, %s59, [#allocation9], 128, 128, 8
    $region17: #{tpu_custom_call.1} parent=1 // pred_fallthru
      _
    // Predicated region
    $region18: #{tpu_custom_call.1} parent=1 // pred_check
      _
    $region19: #{tpu_custom_call.1} parent=1 // pred_check_branch
      %66 = sbr.rel (0) target = $region21
    $region20: #{tpu_custom_call.1} parent=1 // pred_region
      _
    $region21: #{tpu_custom_call.1} parent=1 // pred_fallthru
      _
    // Predicated region
    $region22: #{tpu_custom_call.1} parent=1 // pred_check
      _
    $region23: #{tpu_custom_call.1} parent=1 // pred_check_branch
      %68 = sbr.rel (0) target = $region25
    $region24: #{tpu_custom_call.1} parent=1 // pred_region
      %70 = vsyncadd [#allocation9], 0
      %s71 = sshll.u32 %s5, 4
      %s72 = int_to_ptr.hbm [resolvable:$true] %s71
      %s73 = sshll.u32 [#allocation10], 4
      %s74 = int_to_ptr.vmem [resolvable:$true] %s73
      %79 = dma.hbm_to_vmem [thread:$0]  %s72, 2048, %s74, [#allocation9], 128, 128, 8
    $region25: #{tpu_custom_call.1} parent=1 // pred_fallthru
      _
    // Predicated region
    $region26: #{tpu_custom_call.1} parent=1 // pred_check
      _
    $region27: #{tpu_custom_call.1} parent=1 // pred_check_branch
      %81 = sbr.rel (0) target = $region29
    $region28: #{tpu_custom_call.1} parent=1 // pred_region
      _
    $region29: #{tpu_custom_call.1} parent=1 // pred_fallthru
      _
    // Predicated region
    $region30: #{tpu_custom_call.1} parent=1 // pred_check
      _
    $region31: #{tpu_custom_call.1} parent=1 // pred_check_branch
      %83 = sbr.rel (0) target = $region33
    $region32: #{tpu_custom_call.1} parent=1 // pred_region
      %85 = vsyncadd [#allocation12], 0
      %s86 = sshll.u32 %s7, 4
      %s87 = int_to_ptr.hbm [resolvable:$true] %s86
      %s88 = sshll.u32 [#allocation11], 4
      %s89 = int_to_ptr.vmem [resolvable:$true] %s88
      %94 = dma.hbm_to_vmem [thread:$0]  %s87, 2048, %s89, [#allocation12], 128, 128, 8
    $region33: #{tpu_custom_call.1} parent=1 // pred_fallthru
      _
    // Predicated region
    $region34: #{tpu_custom_call.1} parent=1 // pred_check
      _
    $region35: #{tpu_custom_call.1} parent=1 // pred_check_branch
      %96 = sbr.rel (0) target = $region37
    $region36: #{tpu_custom_call.1} parent=1 // pred_region
      _
    $region37: #{tpu_custom_call.1} parent=1 // pred_fallthru
      _
    // Predicated region
    $region38: #{tpu_custom_call.1} parent=1 // pred_check
      _
    $region39: #{tpu_custom_call.1} parent=1 // pred_check_branch
      %98 = sbr.rel (0) target = $region41
    $region40: #{tpu_custom_call.1} parent=1 // pred_region
      %100 = dma.done [#allocation3], 64
    $region41: #{tpu_custom_call.1} parent=1 // pred_fallthru
      _
    // Predicated region
    $region42: #{tpu_custom_call.1} parent=1 // pred_check
      _
    $region43: #{tpu_custom_call.1} parent=1 // pred_check_branch
      %102 = sbr.rel (0) target = $region45
    $region44: #{tpu_custom_call.1} parent=1 // pred_region
      %104 = dma.done [#allocation6], 64
    $region45: #{tpu_custom_call.1} parent=1 // pred_fallthru
      _
    // Predicated region
    $region46: #{tpu_custom_call.1} parent=1 // pred_check
      _
    $region47: #{tpu_custom_call.1} parent=1 // pred_check_branch
      %106 = sbr.rel (0) target = $region49
    $region48: #{tpu_custom_call.1} parent=1 // pred_region
      %108 = dma.done [#allocation6], 64
    $region49: #{tpu_custom_call.1} parent=1 // pred_fallthru
      _
    // Predicated region
    $region50: #{tpu_custom_call.1} parent=1 // pred_check
      _
    $region51: #{tpu_custom_call.1} parent=1 // pred_check_branch
      %110 = sbr.rel (0) target = $region53
    $region52: #{tpu_custom_call.1} parent=1 // pred_region
      %112 = dma.done [#allocation9], 256
    $region53: #{tpu_custom_call.1} parent=1 // pred_fallthru
      _
    // Predicated region
    $region54: #{tpu_custom_call.1} parent=1 // pred_check
      _
    $region55: #{tpu_custom_call.1} parent=1 // pred_check_branch
      %114 = sbr.rel (0) target = $region57
    $region56: #{tpu_custom_call.1} parent=1 // pred_region
      %116 = dma.done [#allocation9], 2048
    $region57: #{tpu_custom_call.1} parent=1 // pred_fallthru
      _
    // Predicated region
    $region58: #{tpu_custom_call.1} parent=1 // pred_check
      _
    $region59: #{tpu_custom_call.1} parent=1 // pred_check_branch
      %118 = sbr.rel (0) target = $region61
    $region60: #{tpu_custom_call.1} parent=1 // pred_region
      %120 = dma.done [#allocation12], 2048
    $region61: #{tpu_custom_call.1} parent=1 // pred_fallthru
      _
    %v121 = vld [vmem:[#allocation2] sm:$0x3]
    %v122 = vmul.f32 %v121, %v121
    %s123 = scalar_lea.vmem [#allocation2], 2
    %v124 = vld [vmem:[%s123] sm:$0x3]
    %v125 = vadd.f32 %v121, %v124
    %v126 = vmul.f32 %v124, %v124
    %v127 = vadd.f32 %v122, %v126
    %v128 = vmax.f32 %v121, %v124
    %v129 = vmin.f32 %v121, %v124
    %vm130 = vcmask 1041408
    %v131 = vsel %vm130, %v125, 0.0
    %132 = vadd.xlane.f32.xlu0 %v131
    %v133 = vpop.xlane.xlu0 %132
    %v134 = vsel %vm130, %v127, 0.0
    %135 = vadd.xlane.f32.xlu0 %v134
    %v136 = vpop.xlane.xlu0 %135
    %v137 = vsel %vm130, %v128, -inf
    %138 = vmax.xlane.f32.xlu0 %v137
    %v139 = vpop.xlane.xlu0 %138
    %v140 = vsel %vm130, %v129, inf
    %141 = vmin.xlane.f32.xlu0 %v140
    %v142 = vpop.xlane.xlu0 %141
    %v143 = vmul.f32 %v133, 0.00390625
    %v144 = vmul.f32 %v143, 256.0
    %v145 = vmul.f32 %v144, %v143
    %v146 = vsub.f32 %v136, %v145
    %v147 = vrcp.pop 255.0
    %v148 = vmul.f32 255.0, %v147
    %v149 = vsub.f32 1.0, %v148
    %v150 = vmul.f32 %v147, %v149
    %v151 = vadd.f32 %v147, %v150
    %vm152 = vweird.f32 %v147
    %v153 = vsel %vm152, %v147, %v151
    %v154 = vmul.f32 %v146, %v153
    %v155 = vmax.f32 %v154, 0.0
    %v156 = vrsqrt.pop %v155
    %v157 = vmul.f32 %v156, %v155
    %v158 = vmul.f32 %v157, %v156
    %v159 = vmul.f32 0.5, %v158
    %v160 = vsub.f32 1.5, %v159
    %v161 = vmul.f32 %v156, %v160
    %v162 = vmul.f32 %v155, %v161
    %vm163 = vcmp.eq.f32.partialorder %v155, inf
    %v164 = vsel %vm163, %v155, %v162
    %vm165 = vcmp.eq.f32.partialorder %v155, 0.0
    %v166 = vand.u32 %v155, 2147483648
    %v167 = vsel %vm165, %v166, %v164
    %v168 = vld [vmem:[#allocation5] sm:$0x3]
    %v169 = vmul.f32 %v168, %v168
    %s170 = scalar_lea.vmem [#allocation5], 2
    %v171 = vld [vmem:[%s170] sm:$0x3]
    %v172 = vadd.f32 %v168, %v171
    %v173 = vmul.f32 %v171, %v171
    %v174 = vadd.f32 %v169, %v173
    %v175 = vmax.f32 %v168, %v171
    %v176 = vmin.f32 %v168, %v171
    %v177 = vsel %vm130, %v172, 0.0
    %178 = vadd.xlane.f32.xlu0 %v177
    %v179 = vpop.xlane.xlu0 %178
    %v180 = vsel %vm130, %v174, 0.0
    %181 = vadd.xlane.f32.xlu0 %v180
    %v182 = vpop.xlane.xlu0 %181
    %v183 = vsel %vm130, %v175, -inf
    %184 = vmax.xlane.f32.xlu0 %v183
    %v185 = vpop.xlane.xlu0 %184
    %v186 = vsel %vm130, %v176, inf
    %187 = vmin.xlane.f32.xlu0 %v186
    %v188 = vpop.xlane.xlu0 %187
    %v189 = vmul.f32 %v179, 0.00390625
    %v190 = vmul.f32 %v189, 256.0
    %v191 = vmul.f32 %v190, %v189
    %v192 = vsub.f32 %v182, %v191
    %v193 = vmul.f32 %v192, %v153
    %v194 = vmax.f32 %v193, 0.0
    %v195 = vrsqrt.pop %v194
    %v196 = vmul.f32 %v195, %v194
    %v197 = vmul.f32 %v196, %v195
    %v198 = vmul.f32 0.5, %v197
    %v199 = vsub.f32 1.5, %v198
    %v200 = vmul.f32 %v195, %v199
    %v201 = vmul.f32 %v194, %v200
    %vm202 = vcmp.eq.f32.partialorder %v194, inf
    %v203 = vsel %vm202, %v194, %v201
    %vm204 = vcmp.eq.f32.partialorder %v194, 0.0
    %v205 = vand.u32 %v194, 2147483648
    %v206 = vsel %vm204, %v205, %v203
    %v207 = vld [vmem:[#allocation7] sm:$0x3]
    %v208 = vmul.f32 %v207, %v207
    %s209 = scalar_lea.vmem [#allocation7], 2
    %v210 = vld [vmem:[%s209] sm:$0x3]
    %v211 = vadd.f32 %v207, %v210
    %v212 = vmul.f32 %v210, %v210
    %v213 = vadd.f32 %v208, %v212
    %v214 = vmax.f32 %v207, %v210
    %v215 = vmin.f32 %v207, %v210
    %v216 = vsel %vm130, %v211, 0.0
    %217 = vadd.xlane.f32.xlu0 %v216
    %v218 = vpop.xlane.xlu0 %217
    %v219 = vsel %vm130, %v213, 0.0
    %220 = vadd.xlane.f32.xlu0 %v219
    %v221 = vpop.xlane.xlu0 %220
    %v222 = vsel %vm130, %v214, -inf
    %223 = vmax.xlane.f32.xlu0 %v222
    %v224 = vpop.xlane.xlu0 %223
    %v225 = vsel %vm130, %v215, inf
    %226 = vmin.xlane.f32.xlu0 %v225
    %v227 = vpop.xlane.xlu0 %226
    %v228 = vmul.f32 %v218, 0.00390625
    %v229 = vmul.f32 %v228, 256.0
    %v230 = vmul.f32 %v229, %v228
    %v231 = vsub.f32 %v221, %v230
    %v232 = vmul.f32 %v231, %v153
    %v233 = vmax.f32 %v232, 0.0
    %v234 = vrsqrt.pop %v233
    %v235 = vmul.f32 %v234, %v233
    %v236 = vmul.f32 %v235, %v234
    %v237 = vmul.f32 0.5, %v236
    %v238 = vsub.f32 1.5, %v237
    %v239 = vmul.f32 %v234, %v238
    %v240 = vmul.f32 %v233, %v239
    %vm241 = vcmp.eq.f32.partialorder %v233, inf
    %v242 = vsel %vm241, %v233, %v240
    %vm243 = vcmp.eq.f32.partialorder %v233, 0.0
    %v244 = vand.u32 %v233, 2147483648
    %v245 = vsel %vm243, %v244, %v242
    %v246 = vld [vmem:[%s4] sm:$0x1]
    %v247 = vld [vmem:[#allocation8] sm:$0x1]
    %v248 = vperm.slane %v247, 0
    %v249 = vmul.f32 %v143, %v248
    %v251 = vperm.slane %v246, 0
    %v253 = vadd.f32 %v251, %v249
    %v254 = vld [vmem:[#allocation8 + $0x1] sm:$0x1]
    %v255 = vperm.slane %v254, 0
    %v256 = vmul.f32 %v167, %v255
    %v257 = vadd.f32 %v253, %v256
    %v258 = vld [vmem:[#allocation8 + $0x2] sm:$0x1]
    %v259 = vperm.slane %v258, 0
    %v260 = vmul.f32 %v139, %v259
    %v261 = vadd.f32 %v257, %v260
    %v262 = vld [vmem:[#allocation8 + $0x3] sm:$0x1]
    %v263 = vperm.slane %v262, 0
    %v264 = vmul.f32 %v142, %v263
    %v265 = vadd.f32 %v261, %v264
    %v266 = vld [vmem:[#allocation8 + $0x4] sm:$0x1]
    %v267 = vperm.slane %v266, 0
    %v268 = vmul.f32 %v189, %v267
    %v269 = vadd.f32 %v265, %v268
    %v270 = vld [vmem:[#allocation8 + $0x5] sm:$0x1]
    %v271 = vperm.slane %v270, 0
    %v272 = vmul.f32 %v206, %v271
    %v273 = vadd.f32 %v269, %v272
    %v274 = vld [vmem:[#allocation8 + $0x6] sm:$0x1]
    %v275 = vperm.slane %v274, 0
    %v276 = vmul.f32 %v185, %v275
    %v277 = vadd.f32 %v273, %v276
    %v278 = vld [vmem:[#allocation8 + $0x7] sm:$0x1]
    %v279 = vperm.slane %v278, 0
    %v280 = vmul.f32 %v188, %v279
    %v281 = vadd.f32 %v277, %v280
    %v282 = vld [vmem:[#allocation8 + $0x8] sm:$0x1]
    %v283 = vperm.slane %v282, 0
    %v284 = vmul.f32 %v228, %v283
    %v285 = vadd.f32 %v281, %v284
    %v286 = vld [vmem:[#allocation8 + $0x9] sm:$0x1]
    %v287 = vperm.slane %v286, 0
    %v288 = vmul.f32 %v245, %v287
    %v289 = vadd.f32 %v285, %v288
    %v290 = vld [vmem:[#allocation8 + $0xa] sm:$0x1]
    %v291 = vperm.slane %v290, 0
    %v292 = vmul.f32 %v224, %v291
    %v293 = vadd.f32 %v289, %v292
    %v294 = vld [vmem:[#allocation8 + $0xb] sm:$0x1]
    %v295 = vperm.slane %v294, 0
    %v296 = vmul.f32 %v227, %v295
    %v297 = vadd.f32 %v293, %v296
    %v298 = vmax.f32 %v297, 0.0
    %v299 = vld [vmem:[#allocation10] sm:$0xff]
    %v300 = vld [vmem:[#allocation10 + $0x8] sm:$0xff]
    %v301 = vld [vmem:[#allocation10 + $0x10] sm:$0xff]
    %v302 = vld [vmem:[#allocation10 + $0x18] sm:$0xff]
    %v303 = vld [vmem:[#allocation10 + $0x20] sm:$0xff]
    %v304 = vld [vmem:[#allocation10 + $0x28] sm:$0xff]
    %v305 = vld [vmem:[#allocation10 + $0x30] sm:$0xff]
    %v306 = vld [vmem:[#allocation10 + $0x38] sm:$0xff]
    %v307 = vld [vmem:[#allocation10 + $0x40] sm:$0xff]
    %v308 = vld [vmem:[#allocation10 + $0x48] sm:$0xff]
    %v309 = vld [vmem:[#allocation10 + $0x50] sm:$0xff]
    %v310 = vld [vmem:[#allocation10 + $0x58] sm:$0xff]
    %v311 = vld [vmem:[#allocation10 + $0x60] sm:$0xff]
    %v312 = vld [vmem:[#allocation10 + $0x68] sm:$0xff]
    %v313 = vld [vmem:[#allocation10 + $0x70] sm:$0xff]
    %v314 = vld [vmem:[#allocation10 + $0x78] sm:$0xff]
    %v315 = vld [vmem:[%s6] sm:$0x1]
    %v317 = vperm.slane %v315, 0
    %319 = vmatpush.msra.mxu0 %v314
    %320 = vmatpush.msra.mxu0 %v313
    %321 = vmatpush.msra.mxu0 %v312
    %322 = vmatpush.msra.mxu0 %v311
    %323 = vmatpush.msra.mxu0 %v310
    %324 = vmatpush.msra.mxu0 %v309
    %325 = vmatpush.msra.mxu0 %v308
    %326 = vmatpush.msra.mxu0 %v307
    %327 = vmatpush.msra.mxu0 %v306
    %328 = vmatpush.msra.mxu0 %v305
    %329 = vmatpush.msra.mxu0 %v304
    %330 = vmatpush.msra.mxu0 %v303
    %331 = vmatpush.msra.mxu0 %v302
    %332 = vmatpush.msra.mxu0 %v301
    %333 = vmatpush.msra.mxu0 %v300
    %334 = vmatpush.msra.mxu0 %v299
    %335 = vmatmul.f32.gmra.mxu0 %v298
    %v336 = vpop.f32.mrf.mxu0
    %v337 = vadd.f32 %v317, %v336
    %338 = vdwg.mxu0
    %v339 = vmax.f32 %v337, 0.0
    %v340 = vld [vmem:[#allocation11] sm:$0xff]
    %v341 = vld [vmem:[#allocation11 + $0x8] sm:$0xff]
    %v342 = vld [vmem:[#allocation11 + $0x10] sm:$0xff]
    %v343 = vld [vmem:[#allocation11 + $0x18] sm:$0xff]
    %v344 = vld [vmem:[#allocation11 + $0x20] sm:$0xff]
    %v345 = vld [vmem:[#allocation11 + $0x28] sm:$0xff]
    %v346 = vld [vmem:[#allocation11 + $0x30] sm:$0xff]
    %v347 = vld [vmem:[#allocation11 + $0x38] sm:$0xff]
    %v348 = vld [vmem:[#allocation11 + $0x40] sm:$0xff]
    %v349 = vld [vmem:[#allocation11 + $0x48] sm:$0xff]
    %v350 = vld [vmem:[#allocation11 + $0x50] sm:$0xff]
    %v351 = vld [vmem:[#allocation11 + $0x58] sm:$0xff]
    %v352 = vld [vmem:[#allocation11 + $0x60] sm:$0xff]
    %v353 = vld [vmem:[#allocation11 + $0x68] sm:$0xff]
    %v354 = vld [vmem:[#allocation11 + $0x70] sm:$0xff]
    %v355 = vld [vmem:[#allocation11 + $0x78] sm:$0xff]
    %v356 = vld [vmem:[%s8] sm:$0x1]
    %v358 = vperm.slane %v356, 0
    %360 = vmatpush.msra.mxu0 %v355
    %361 = vmatpush.msra.mxu0 %v354
    %362 = vmatpush.msra.mxu0 %v353
    %363 = vmatpush.msra.mxu0 %v352
    %364 = vmatpush.msra.mxu0 %v351
    %365 = vmatpush.msra.mxu0 %v350
    %366 = vmatpush.msra.mxu0 %v349
    %367 = vmatpush.msra.mxu0 %v348
    %368 = vmatpush.msra.mxu0 %v347
    %369 = vmatpush.msra.mxu0 %v346
    %370 = vmatpush.msra.mxu0 %v345
    %371 = vmatpush.msra.mxu0 %v344
    %372 = vmatpush.msra.mxu0 %v343
    %373 = vmatpush.msra.mxu0 %v342
    %374 = vmatpush.msra.mxu0 %v341
    %375 = vmatpush.msra.mxu0 %v340
    %376 = vmatmul.f32.gmra.mxu0 %v339
    %v377 = vpop.f32.mrf.mxu0
    %v378 = vadd.f32 %v358, %v377
    %379 = vdwg.mxu0
    %380 = vst [vmem:[#allocation13] sm:$0x3] %v378
    // Predicated region
    $region62: #{tpu_custom_call.1} parent=1 // pred_check
      _
    $region63: #{tpu_custom_call.1} parent=1 // pred_check_branch
      %382 = sbr.rel (0) target = $region65
    $region64: #{tpu_custom_call.1} parent=1 // pred_region
      %384 = vsyncadd [#allocation4], 0
      %s386 = sshll.u32 [#allocation13], 4
      %s387 = int_to_ptr.vmem [resolvable:$true] %s386
      %s388 = sshll.u32 %s9, 4
      %s389 = int_to_ptr.hbm [resolvable:$true] %s388
      %391 = dma.vmem_to_hbm [thread:$0]  %s387, 32, %s389, [#allocation4]
    $region65: #{tpu_custom_call.1} parent=1 // pred_fallthru
      _
    // Predicated region
    $region66: #{tpu_custom_call.1} parent=1 // pred_check
      _
    $region67: #{tpu_custom_call.1} parent=1 // pred_check_branch
      %393 = sbr.rel (0) target = $region69
    $region68: #{tpu_custom_call.1} parent=1 // pred_region
      %395 = dma.done [#allocation4], 32
    $region69: #{tpu_custom_call.1} parent=1 // pred_fallthru
      _
    %396 = vsyncpa [#allocation3], 1
    %397 = vsyncpa [#allocation6], 1
    %398 = vsyncpa [#allocation9], 1
    %399 = vsyncpa [#allocation12], 1
    %400 = vsyncpa [#allocation4], 1

</llo_original>
